<compile_context>
chip_gen: v7x
topology: tpu7x:2x2x1
jax: 0.10.0
libtpu: 0.0.40
codegen_flags: <defaults>
</compile_context>

<pallas_src>
import jax
import jax.numpy as jnp
from jax.experimental import pallas as pl
from jax.experimental.pallas import tpu as pltpu

# ----------------------------- config ---------------------------------------
B = 2        # batch
L = 8        # sequence length
D = 32       # d_model
BG = 2.0     # gate bias init (torch.full([d_model], 2))


# ----------------------------- kernel ---------------------------------------
def gru_gate_kernel(
    x_ref, y_ref,        # (N, D) each
    w_ref,               # (2D, 3D)  fused [[Wr, Wz, Wg], [Ur, Uz, 0]]
    b_ref,               # (1, 3D)   fused [bWr+bUr | bWz+bUz-bg | bWg+bUg]
    ug_ref,              # (D, D)    Ug
    out_ref,             # (N, D)
):
    d = x_ref.shape[-1]
    x = x_ref[...]                                    # (N, D)
    y = y_ref[...]                                    # (N, D)

    # One K=2D, Nout=3D matmul covers the r / z preactivations and Wg(y).
    yx = jnp.concatenate([y, x], axis=-1)             # (N, 2D)
    pre = jnp.dot(yx, w_ref[...],
                  preferred_element_type=jnp.float32) + b_ref[...]   # (N, 3D)

    r = jax.nn.sigmoid(pre[:, :d])                    # sigmoid(Wr(y)+Ur(x))
    z = jax.nn.sigmoid(pre[:, d:2 * d])               # sigmoid(Wz(y)+Uz(x)-bg)
    h = jnp.tanh(pre[:, 2 * d:]                       # Wg(y)+bWg+bUg
                 + jnp.dot(r * x, ug_ref[...],
                           preferred_element_type=jnp.float32))      # + Ug(r*x)

    out_ref[...] = (1.0 - z) * x + z * h


# ----------------------------- wrapper ---------------------------------------
def fuse_params(p):
    """One-time, host-side parameter transform (K/N-fusion + constant folding)."""
    d = p["Wr_w"].shape[0]
    zero = jnp.zeros((d, d), jnp.float32)
    w_y = jnp.concatenate([p["Wr_w"], p["Wz_w"], p["Wg_w"]], axis=1)   # (D, 3D) acts on y
    w_x = jnp.concatenate([p["Ur_w"], p["Uz_w"], zero], axis=1)        # (D, 3D) acts on x
    w_fused = jnp.concatenate([w_y, w_x], axis=0)                      # (2D, 3D)
    b_r = p["Wr_b"] + p["Ur_b"]
    b_z = p["Wz_b"] + p["Uz_b"] - p["bg"]                              # bg folded
    b_g = p["Wg_b"] + p["Ug_b"]
    b_fused = jnp.concatenate([b_r, b_z, b_g])[None, :]                # (1, 3D)
    return w_fused, b_fused, p["Ug_w"]


def gating_mechanism(x, y, fused):
    """x, y: (..., D) float32.  Returns the gated output with the same shape."""
    w_fused, b_fused, ug = fused
    orig_shape = x.shape
    d = orig_shape[-1]
    xf = x.reshape(-1, d)            # flatten all leading dims into token rows
    yf = y.reshape(-1, d)
    n = xf.shape[0]

    vmem_spec = pl.BlockSpec(memory_space=pltpu.MemorySpace.VMEM)   # whole-array block
    cost = pl.CostEstimate(
        flops=2 * n * (2 * d) * (3 * d) + 2 * n * d * d + 8 * n * d,
        transcendentals=3 * n * d,                                   # 2x sigmoid + tanh
        bytes_accessed=4 * (3 * n * d + (2 * d) * (3 * d) + 3 * d + d * d),
    )
    out = pl.pallas_call(
        gru_gate_kernel,
        out_shape=jax.ShapeDtypeStruct((n, d), jnp.float32),
        in_specs=[vmem_spec] * 5,
        out_specs=vmem_spec,
        cost_estimate=cost,
    )(xf, yf, w_fused, b_fused, ug)
    return out.reshape(orig_shape)


# --------------------------- reference (pure JAX) ----------------------------
def reference(x, y, p):
    lin = lambda w, b, inp: inp @ w + b
    r = jax.nn.sigmoid(lin(p["Wr_w"], p["Wr_b"], y) + lin(p["Ur_w"], p["Ur_b"], x))
    z = jax.nn.sigmoid(lin(p["Wz_w"], p["Wz_b"], y) + lin(p["Uz_w"], p["Uz_b"], x) - p["bg"])
    h = jnp.tanh(lin(p["Wg_w"], p["Wg_b"], y) + lin(p["Ug_w"], p["Ug_b"], r * x))
    return (1.0 - z) * x + z * h


# ----------------------------- main -------------------------------------------
if __name__ == "__main__":
    key = jax.random.PRNGKey(0)
    keys = jax.random.split(key, 16)
    ki = iter(keys)
    nrm = lambda shape, s=0.1: s * jax.random.normal(next(ki), shape, dtype=jnp.float32)

    # Weights stored pre-transposed ((in, out)) so the kernel computes
    # inp @ W + b, matching torch.nn.Linear semantics (inp @ W_torch.T + b).
    params = {
        "Wr_w": nrm((D, D)), "Wr_b": nrm((D,)),
        "Ur_w": nrm((D, D)), "Ur_b": nrm((D,)),
        "Wz_w": nrm((D, D)), "Wz_b": nrm((D,)),
        "Uz_w": nrm((D, D)), "Uz_b": nrm((D,)),
        "Wg_w": nrm((D, D)), "Wg_b": nrm((D,)),
        "Ug_w": nrm((D, D)), "Ug_b": nrm((D,)),
        "bg": jnp.full((D,), BG, jnp.float32),
    }
    fused = fuse_params(params)

    x = jax.random.normal(jax.random.PRNGKey(1), (B, L, D), dtype=jnp.float32)
    y = jax.random.normal(jax.random.PRNGKey(2), (B, L, D), dtype=jnp.float32)

    out = gating_mechanism(x, y, fused)
    out = jax.block_until_ready(out)

    ref = reference(x, y, params)
    assert out.shape == (B, L, D)
    assert jnp.allclose(out, ref, atol=1e-5, rtol=1e-5), float(jnp.max(jnp.abs(out - ref)))

    print("KERNEL_OK")
</pallas_src>

<mosaic_0001>
module attributes {stable_mosaic.version = 11 : i64} {
  func.func @gru_gate_kernel(%arg0: memref<16x32xf32, #tpu.memory_space<vmem>>, %arg1: memref<16x32xf32, #tpu.memory_space<vmem>>, %arg2: memref<64x96xf32, #tpu.memory_space<vmem>>, %arg3: memref<1x96xf32, #tpu.memory_space<vmem>>, %arg4: memref<32x32xf32, #tpu.memory_space<vmem>>, %arg5: memref<16x32xf32, #tpu.memory_space<vmem>>) attributes {dimension_semantics = [], scalar_prefetch = 0 : i64, scratch_operands = 0 : i64, tpu.core_type = #tpu.core_type<tc>} {
    %c0 = arith.constant 0 : index
    %c0_0 = arith.constant 0 : index
    %0 = vector.load %arg0[%c0, %c0_0] : memref<16x32xf32, #tpu.memory_space<vmem>>, vector<16x32xf32>
    %c0_1 = arith.constant 0 : index
    %c0_2 = arith.constant 0 : index
    %1 = vector.load %arg1[%c0_1, %c0_2] : memref<16x32xf32, #tpu.memory_space<vmem>>, vector<16x32xf32>
    %2 = tpu.concatenate %1, %0 in 1 : vector<16x32xf32>, vector<16x32xf32> -> vector<16x64xf32>
    %c0_3 = arith.constant 0 : index
    %c0_4 = arith.constant 0 : index
    %3 = vector.load %arg2[%c0_3, %c0_4] : memref<64x96xf32, #tpu.memory_space<vmem>>, vector<64x96xf32>
    %cst = arith.constant dense<0.000000e+00> : vector<16x96xf32>
    %4 = tpu.matmul %2, %3, %cst {dimension_numbers = #tpu.dot_dimension_numbers<[1], [0], [0], [1], [0, 0, 1, 1], [], []>} : vector<16x64xf32>, vector<64x96xf32>, vector<16x96xf32> -> vector<16x96xf32>
    %c0_5 = arith.constant 0 : index
    %c0_6 = arith.constant 0 : index
    %5 = vector.load %arg3[%c0_5, %c0_6] : memref<1x96xf32, #tpu.memory_space<vmem>>, vector<1x96xf32>
    %6 = vector.broadcast %5 : vector<1x96xf32> to vector<16x96xf32>
    %7 = arith.addf %4, %6 : vector<16x96xf32>
    %8 = vector.extract_strided_slice %7 {offsets = [0, 0], sizes = [16, 32], strides = [1, 1]} : vector<16x96xf32> to vector<16x32xf32>
    %9 = arith.negf %8 : vector<16x32xf32>
    %10 = math.exp %9 : vector<16x32xf32>
    %cst_7 = arith.constant 1.000000e+00 : f32
    %11 = vector.broadcast %cst_7 : f32 to vector<16x32xf32>
    %12 = arith.addf %11, %10 : vector<16x32xf32>
    %13 = arith.divf %11, %12 : vector<16x32xf32>
    %14 = vector.extract_strided_slice %7 {offsets = [0, 32], sizes = [16, 32], strides = [1, 1]} : vector<16x96xf32> to vector<16x32xf32>
    %15 = arith.negf %14 : vector<16x32xf32>
    %16 = math.exp %15 : vector<16x32xf32>
    %cst_8 = arith.constant 1.000000e+00 : f32
    %17 = vector.broadcast %cst_8 : f32 to vector<16x32xf32>
    %18 = arith.addf %17, %16 : vector<16x32xf32>
    %19 = arith.divf %17, %18 : vector<16x32xf32>
    %20 = vector.extract_strided_slice %7 {offsets = [0, 64], sizes = [16, 32], strides = [1, 1]} : vector<16x96xf32> to vector<16x32xf32>
    %21 = arith.mulf %13, %0 : vector<16x32xf32>
    %c0_9 = arith.constant 0 : index
    %c0_10 = arith.constant 0 : index
    %22 = vector.load %arg4[%c0_9, %c0_10] : memref<32x32xf32, #tpu.memory_space<vmem>>, vector<32x32xf32>
    %cst_11 = arith.constant dense<0.000000e+00> : vector<16x32xf32>
    %23 = tpu.matmul %21, %22, %cst_11 {dimension_numbers = #tpu.dot_dimension_numbers<[1], [0], [0], [1], [0, 0, 1, 1], [], []>} : vector<16x32xf32>, vector<32x32xf32>, vector<16x32xf32> -> vector<16x32xf32>
    %24 = arith.addf %20, %23 : vector<16x32xf32>
    %25 = math.tanh %24 : vector<16x32xf32>
    %cst_12 = arith.constant 1.000000e+00 : f32
    %26 = vector.broadcast %cst_12 : f32 to vector<16x32xf32>
    %27 = arith.subf %26, %19 : vector<16x32xf32>
    %28 = arith.mulf %27, %0 : vector<16x32xf32>
    %29 = arith.mulf %19, %25 : vector<16x32xf32>
    %30 = arith.addf %28, %29 : vector<16x32xf32>
    %c0_13 = arith.constant 0 : index
    %c0_14 = arith.constant 0 : index
    %31 = vector.load %arg5[%c0_13, %c0_14] : memref<16x32xf32, #tpu.memory_space<vmem>>, vector<16x32xf32>
    tpu.vector_store %arg5[%c0_13, %c0_14], %30 {strides = array<i32>} : memref<16x32xf32, #tpu.memory_space<vmem>>, vector<16x32xf32>,
    return
  }
}

</mosaic_0001>

<llo_original>
// kernel: tpu_custom_call.1
$region0: #{tpu_custom_call.1}
  #allocation0 [shape = 'u32[]', space=smem, size = 0x4, offset = 0x4, fixed_abs, tag = 'smem constant byte address 0x4 - core index']
  #allocation1 [shape = 'u32[144,128]{1,0:T(1,128)}', space=vmem, size = 0x12000, scoped, tag = 'internal scratch']
  %s0 = inlined_call_operand.hbm [shape: f32[16,32], index: 0, kind: input, shape index: {}]
  %s1 = inlined_call_operand.hbm [shape: f32[16,32], index: 1, kind: input, shape index: {}]
  %s2 = inlined_call_operand.hbm [shape: f32[64,96], index: 2, kind: input, shape index: {}]
  %s3 = inlined_call_operand.vmem [shape: f32[1,96], index: 3, kind: input, shape index: {}]
  %s4 = inlined_call_operand.hbm [shape: f32[32,32], index: 4, kind: input, shape index: {}]
  %s5 = inlined_call_operand.hbm [shape: f32[16,32], index: 5, kind: output, shape index: {}]
  %s6 = sld [smem:[#allocation0]]
  $region46: #{tpu_custom_call.1} parent=0
    _
  %s8 = ssub.s32 1, %s6
  %s9 = scalar_select 0, %s8, %s6
  $region1: #{tpu_custom_call.1} parent=0
    #allocation2 [shape = 'u8[8192]{0}', space=vmem, size = 0x2000, scoped, tag = 'input window, operand 0, single buffered']
    #allocation3 [shape = 's32[1]{0}', space=sflag, size = 0x4, scoped, tag = 'scoped memory for tpu_custom_call.1']
    #allocation4 [shape = 's32[1]{0}', space=sflag, size = 0x4, scoped, tag = 'scoped memory for tpu_custom_call.1']
    #allocation5 [shape = 'u8[8192]{0}', space=vmem, size = 0x2000, scoped, tag = 'input window, operand 1, single buffered']
    #allocation6 [shape = 's32[1]{0}', space=sflag, size = 0x4, scoped, tag = 'scoped memory for tpu_custom_call.1']
    #allocation7 [shape = 'u8[32768]{0}', space=vmem, size = 0x8000, scoped, tag = 'input window, operand 2, single buffered']
    #allocation8 [shape = 'u8[16384]{0}', space=vmem, size = 0x4000, scoped, tag = 'input window, operand 4, single buffered']
    #allocation9 [shape = 's32[1]{0}', space=sflag, size = 0x4, scoped, tag = 'scoped memory for tpu_custom_call.1']
    #allocation10 [shape = 'u8[8192]{0}', space=vmem, size = 0x2000, scoped, tag = 'output window, operand 0, single buffered']
    %10 = vsyncpa [#allocation3], 0
    %11 = vsyncpa [#allocation6], 0
    %12 = vsyncpa [#allocation9], 0
    %13 = vsyncpa [#allocation4], 0
    // Predicated region
    $region2: #{tpu_custom_call.1} parent=1 // pred_check
      _
    $region3: #{tpu_custom_call.1} parent=1 // pred_check_branch
      %15 = sbr.rel (0) target = $region5
    $region4: #{tpu_custom_call.1} parent=1 // pred_region
      %s17 = ssub.s32 256, 256
      %18 = vsyncadd [#allocation3], %s17
      %s19 = sshll.u32 [#allocation2], 4
      %s20 = int_to_ptr.vmem [resolvable:$true] %s19
      %25 = dma.hbm_to_vmem [thread:$0]  %s0, 256, %s20, [#allocation3], 128, 128, 8
    $region5: #{tpu_custom_call.1} parent=1 // pred_fallthru
      _
    // Predicated region
    $region6: #{tpu_custom_call.1} parent=1 // pred_check
      _
    $region7: #{tpu_custom_call.1} parent=1 // pred_check_branch
      %27 = sbr.rel (0) target = $region9
    $region8: #{tpu_custom_call.1} parent=1 // pred_region
      %s29 = ssub.s32 256, 256
      %30 = vsyncadd [#allocation6], %s29
      %s31 = sshll.u32 [#allocation5], 4
      %s32 = int_to_ptr.vmem [resolvable:$true] %s31
      %37 = dma.hbm_to_vmem [thread:$0]  %s1, 256, %s32, [#allocation6], 128, 128, 8
    $region9: #{tpu_custom_call.1} parent=1 // pred_fallthru
      _
    // Predicated region
    $region10: #{tpu_custom_call.1} parent=1 // pred_check
      _
    $region11: #{tpu_custom_call.1} parent=1 // pred_check_branch
      %39 = sbr.rel (0) target = $region13
    $region12: #{tpu_custom_call.1} parent=1 // pred_region
      %s41 = ssub.s32 1024, 1024
      %42 = vsyncadd [#allocation6], %s41
      %s43 = sshll.u32 [#allocation7], 4
      %s44 = int_to_ptr.vmem [resolvable:$true] %s43
      %49 = dma.hbm_to_vmem [thread:$0]  %s2, 1024, %s44, [#allocation6], 128, 128, 8
    $region13: #{tpu_custom_call.1} parent=1 // pred_fallthru
      _
    // Predicated region
    $region14: #{tpu_custom_call.1} parent=1 // pred_check
      _
    $region15: #{tpu_custom_call.1} parent=1 // pred_check_branch
      %51 = sbr.rel (0) target = $region17
    $region16: #{tpu_custom_call.1} parent=1 // pred_region
      _
    $region17: #{tpu_custom_call.1} parent=1 // pred_fallthru
      _
    // Predicated region
    $region18: #{tpu_custom_call.1} parent=1 // pred_check
      _
    $region19: #{tpu_custom_call.1} parent=1 // pred_check_branch
      %53 = sbr.rel (0) target = $region21
    $region20: #{tpu_custom_call.1} parent=1 // pred_region
      %s55 = ssub.s32 512, 512
      %56 = vsyncadd [#allocation9], %s55
      %s57 = sshll.u32 [#allocation8], 4
      %s58 = int_to_ptr.vmem [resolvable:$true] %s57
      %63 = dma.hbm_to_vmem [thread:$0]  %s4, 512, %s58, [#allocation9], 128, 128, 8
    $region21: #{tpu_custom_call.1} parent=1 // pred_fallthru
      _
    // Predicated region
    $region22: #{tpu_custom_call.1} parent=1 // pred_check
      _
    $region23: #{tpu_custom_call.1} parent=1 // pred_check_branch
      %65 = sbr.rel (0) target = $region25
    $region24: #{tpu_custom_call.1} parent=1 // pred_region
      %66 = dma.done [#allocation3], 256
    $region25: #{tpu_custom_call.1} parent=1 // pred_fallthru
      _
    // Predicated region
    $region26: #{tpu_custom_call.1} parent=1 // pred_check
      _
    $region27: #{tpu_custom_call.1} parent=1 // pred_check_branch
      %68 = sbr.rel (0) target = $region29
    $region28: #{tpu_custom_call.1} parent=1 // pred_region
      %69 = dma.done [#allocation6], 256
    $region29: #{tpu_custom_call.1} parent=1 // pred_fallthru
      _
    // Predicated region
    $region30: #{tpu_custom_call.1} parent=1 // pred_check
      _
    $region31: #{tpu_custom_call.1} parent=1 // pred_check_branch
      %71 = sbr.rel (0) target = $region33
    $region32: #{tpu_custom_call.1} parent=1 // pred_region
      %72 = dma.done [#allocation6], 1024
    $region33: #{tpu_custom_call.1} parent=1 // pred_fallthru
      _
    // Predicated region
    $region34: #{tpu_custom_call.1} parent=1 // pred_check
      _
    $region35: #{tpu_custom_call.1} parent=1 // pred_check_branch
      %74 = sbr.rel (0) target = $region37
    $region36: #{tpu_custom_call.1} parent=1 // pred_region
      %75 = dma.done [#allocation9], 512
    $region37: #{tpu_custom_call.1} parent=1 // pred_fallthru
      _
    %v76 = vld [vmem:[#allocation2] sm:$0xff]
    %v77 = vld [vmem:[#allocation2 + $0x8] sm:$0xff]
    %v78 = vld [vmem:[#allocation5] sm:$0xff]
    %v79 = vld [vmem:[#allocation5 + $0x8] sm:$0xff]
    %82 = vrot.lane.b32.xlu0 %v76, 32
    %v83 = vpop.permute.xlu0 %82
    %84 = vrot.lane.b32.xlu0 %v77, 32
    %v85 = vpop.permute.xlu0 %84
    %vm88 = vcmask 261120
    %v89 = vsel %vm88, %v78, %v83
    %v90 = vsel %vm88, %v79, %v85
    %v91 = vld [vmem:[#allocation7] sm:$0xff]
    %v92 = vld [vmem:[#allocation7 + $0x8] sm:$0xff]
    %v93 = vld [vmem:[#allocation7 + $0x10] sm:$0xff]
    %v94 = vld [vmem:[#allocation7 + $0x18] sm:$0xff]
    %v95 = vld [vmem:[#allocation7 + $0x20] sm:$0xff]
    %v96 = vld [vmem:[#allocation7 + $0x28] sm:$0xff]
    %v97 = vld [vmem:[#allocation7 + $0x30] sm:$0xff]
    %v98 = vld [vmem:[#allocation7 + $0x38] sm:$0xff]
    %v99 = vld [vmem:[%s3] sm:$0x1]
    %v101 = vlaneseq
    %v102 = vshrl.u32 %v101, 7
    %v103 = vsub.s32 0, %v102
    %v104 = vrot.slane %v99, %v103
    %vm106 = vcmask 523264
    %v108 = vsel %vm106, %v89, 0
    %v111 = vsel %vm106, %v90, 0
    %113 = vmatprep.subr.mxu0 0.0
    %114 = vmatpush1.msra.mxu0 %v91
    %115 = vmatprep.subr.mxu0 0.0
    %116 = vmatpush1.msra.mxu0 %v92
    %117 = vmatprep.subr.mxu0 0.0
    %118 = vmatpush1.msra.mxu0 %v93
    %119 = vmatprep.subr.mxu0 0.0
    %120 = vmatpush1.msra.mxu0 %v94
    %121 = vmatprep.subr.mxu0 0.0
    %122 = vmatpush1.msra.mxu0 %v95
    %123 = vmatprep.subr.mxu0 0.0
    %124 = vmatpush1.msra.mxu0 %v96
    %125 = vmatprep.subr.mxu0 0.0
    %126 = vmatpush1.msra.mxu0 %v97
    %127 = vmatprep.subr.mxu0 0.0
    %128 = vmatpush1.msra.mxu0 %v98
    %129 = vmatprep.subr.mxu0 0.0
    %130 = vmatpush1.msra.mxu0 0.0
    %131 = vmatprep.subr.mxu0 0.0
    %132 = vmatpush1.msra.mxu0 0.0
    %133 = vmatprep.subr.mxu0 0.0
    %134 = vmatpush1.msra.mxu0 0.0
    %135 = vmatprep.subr.mxu0 0.0
    %136 = vmatpush1.msra.mxu0 0.0
    %137 = vmatprep.subr.mxu0 0.0
    %138 = vmatpush1.msra.mxu0 0.0
    %139 = vmatprep.subr.mxu0 0.0
    %140 = vmatpush1.msra.mxu0 0.0
    %141 = vmatprep.subr.mxu0 0.0
    %142 = vmatpush1.msra.mxu0 0.0
    %143 = vmatprep.subr.mxu0 0.0
    %144 = vmatpush1.msra.mxu0 0.0
    %145 = vmatprep.subr.mxu0 0.0
    %146 = vmatpush1.msra.mxu0 0.0
    %147 = vmatprep.subr.mxu0 0.0
    %148 = vmatpush1.msra.mxu0 0.0
    %149 = vmatprep.subr.mxu0 0.0
    %150 = vmatpush1.msra.mxu0 0.0
    %151 = vmatprep.subr.mxu0 0.0
    %152 = vmatpush1.msra.mxu0 0.0
    %153 = vmatprep.subr.mxu0 0.0
    %154 = vmatpush1.msra.mxu0 0.0
    %155 = vmatprep.subr.mxu0 0.0
    %156 = vmatpush1.msra.mxu0 0.0
    %157 = vmatprep.subr.mxu0 0.0
    %158 = vmatpush1.msra.mxu0 0.0
    %159 = vmatprep.subr.mxu0 0.0
    %160 = vmatpush1.msra.mxu0 0.0
    %161 = vmatprep.subr.mxu0 0.0
    %162 = vmatpush1.msra.mxu0 0.0
    %163 = vmatprep.subr.mxu0 0.0
    %164 = vmatpush1.msra.mxu0 0.0
    %165 = vmatprep.subr.mxu0 0.0
    %166 = vmatpush1.msra.mxu0 0.0
    %167 = vmatprep.subr.mxu0 0.0
    %168 = vmatpush1.msra.mxu0 0.0
    %169 = vmatprep.subr.mxu0 0.0
    %170 = vmatpush1.msra.mxu0 0.0
    %171 = vmatprep.subr.mxu0 0.0
    %172 = vmatpush1.msra.mxu0 0.0
    %173 = vmatprep.subr.mxu0 0.0
    %174 = vmatpush1.msra.mxu0 0.0
    %175 = vmatprep.subr.mxu0 0.0
    %176 = vmatpush1.msra.mxu0 0.0
    %177 = vmatprep.mubr.f32.mxu0 0.0
    %178 = vmatmul.mubr.f32.gmra.mrb[0].mxu0 %v108
    %v179 = vpop.f32.mrb[0].mxu0
    %v180 = vadd.f32 %v104, %v179
    %v181 = vpop.f32.mrb[0].mxu0
    %182 = vmatprep.mubr.f32.mxu0 0.0
    %183 = vmatmul.mubr.f32.gmra.mrb[0].mxu0 %v111
    %v184 = vpop.f32.mrb[0].mxu0
    %v185 = vadd.f32 %v104, %v184
    %v186 = vpop.f32.mrb[0].mxu0
    %187 = vdwg.mxu0
    %v188 = vxor.u32 %v180, 2147483648
    %v189 = vxor.u32 %v185, 2147483648
    %v190 = vmul.f32 %v188, 1.442695
    %v191 = vpow.pop %v190
    %v192 = vmul.f32 %v189, 1.442695
    %v193 = vpow.pop %v192
    %v194 = vadd.f32 %v191, 1.0
    %v195 = vadd.f32 %v193, 1.0
    %v196 = vrcp.pop %v194
    %v197 = vmul.f32 1.0, %v196
    %v198 = vrcp.pop %v195
    %v199 = vmul.f32 1.0, %v198
    %v200 = vmul.f32 %v197, %v76
    %v201 = vmul.f32 %v199, %v77
    %v202 = vld [vmem:[#allocation8] sm:$0xff]
    %v203 = vld [vmem:[#allocation8 + $0x8] sm:$0xff]
    %v204 = vld [vmem:[#allocation8 + $0x10] sm:$0xff]
    %v205 = vld [vmem:[#allocation8 + $0x18] sm:$0xff]
    %v207 = vsel %vm88, %v200, 0
    %v210 = vsel %vm88, %v201, 0
    %212 = vmatprep.subr.mxu0 0.0
    %213 = vmatpush1.msra.mxu0 %v202
    %214 = vmatprep.subr.mxu0 0.0
    %215 = vmatpush1.msra.mxu0 %v203
    %216 = vmatprep.subr.mxu0 0.0
    %217 = vmatpush1.msra.mxu0 %v204
    %218 = vmatprep.subr.mxu0 0.0
    %219 = vmatpush1.msra.mxu0 %v205
    %220 = vmatprep.subr.mxu0 0.0
    %221 = vmatpush1.msra.mxu0 0.0
    %222 = vmatprep.subr.mxu0 0.0
    %223 = vmatpush1.msra.mxu0 0.0
    %224 = vmatprep.subr.mxu0 0.0
    %225 = vmatpush1.msra.mxu0 0.0
    %226 = vmatprep.subr.mxu0 0.0
    %227 = vmatpush1.msra.mxu0 0.0
    %228 = vmatprep.subr.mxu0 0.0
    %229 = vmatpush1.msra.mxu0 0.0
    %230 = vmatprep.subr.mxu0 0.0
    %231 = vmatpush1.msra.mxu0 0.0
    %232 = vmatprep.subr.mxu0 0.0
    %233 = vmatpush1.msra.mxu0 0.0
    %234 = vmatprep.subr.mxu0 0.0
    %235 = vmatpush1.msra.mxu0 0.0
    %236 = vmatprep.subr.mxu0 0.0
    %237 = vmatpush1.msra.mxu0 0.0
    %238 = vmatprep.subr.mxu0 0.0
    %239 = vmatpush1.msra.mxu0 0.0
    %240 = vmatprep.subr.mxu0 0.0
    %241 = vmatpush1.msra.mxu0 0.0
    %242 = vmatprep.subr.mxu0 0.0
    %243 = vmatpush1.msra.mxu0 0.0
    %244 = vmatprep.subr.mxu0 0.0
    %245 = vmatpush1.msra.mxu0 0.0
    %246 = vmatprep.subr.mxu0 0.0
    %247 = vmatpush1.msra.mxu0 0.0
    %248 = vmatprep.subr.mxu0 0.0
    %249 = vmatpush1.msra.mxu0 0.0
    %250 = vmatprep.subr.mxu0 0.0
    %251 = vmatpush1.msra.mxu0 0.0
    %252 = vmatprep.subr.mxu0 0.0
    %253 = vmatpush1.msra.mxu0 0.0
    %254 = vmatprep.subr.mxu0 0.0
    %255 = vmatpush1.msra.mxu0 0.0
    %256 = vmatprep.subr.mxu0 0.0
    %257 = vmatpush1.msra.mxu0 0.0
    %258 = vmatprep.subr.mxu0 0.0
    %259 = vmatpush1.msra.mxu0 0.0
    %260 = vmatprep.subr.mxu0 0.0
    %261 = vmatpush1.msra.mxu0 0.0
    %262 = vmatprep.subr.mxu0 0.0
    %263 = vmatpush1.msra.mxu0 0.0
    %264 = vmatprep.subr.mxu0 0.0
    %265 = vmatpush1.msra.mxu0 0.0
    %266 = vmatprep.subr.mxu0 0.0
    %267 = vmatpush1.msra.mxu0 0.0
    %268 = vmatprep.subr.mxu0 0.0
    %269 = vmatpush1.msra.mxu0 0.0
    %270 = vmatprep.subr.mxu0 0.0
    %271 = vmatpush1.msra.mxu0 0.0
    %272 = vmatprep.subr.mxu0 0.0
    %273 = vmatpush1.msra.mxu0 0.0
    %274 = vmatprep.subr.mxu0 0.0
    %275 = vmatpush1.msra.mxu0 0.0
    %276 = vmatprep.mubr.f32.mxu0 0.0
    %277 = vmatmul.mubr.f32.gmra.mrb[0].mxu0 %v207
    %v278 = vpop.f32.mrb[0].mxu0
    %v279 = vadd.f32 0.0, %v278
    %v280 = vpop.f32.mrb[0].mxu0
    %281 = vmatprep.mubr.f32.mxu0 0.0
    %282 = vmatmul.mubr.f32.gmra.mrb[0].mxu0 %v210
    %v283 = vpop.f32.mrb[0].mxu0
    %v284 = vadd.f32 0.0, %v283
    %v285 = vpop.f32.mrb[0].mxu0
    %286 = vdwg.mxu0
    %289 = vrot.lane.b32.xlu0 %v279, 64
    %v290 = vpop.permute.xlu0 %289
    %291 = vrot.lane.b32.xlu0 %v284, 64
    %v292 = vpop.permute.xlu0 %291
    %v295 = vadd.f32 %v180, %v290
    %v296 = vadd.f32 %v185, %v292
    %v297 = vtanh.pop %v295
    %v298 = vtanh.pop %v296
    %v299 = vsub.f32 1.0, %v197
    %v300 = vsub.f32 1.0, %v199
    %v301 = vmul.f32 %v299, %v83
    %v302 = vmul.f32 %v300, %v85
    %305 = vrot.lane.b32.xlu0 %v297, 96
    %v306 = vpop.permute.xlu0 %305
    %307 = vrot.lane.b32.xlu0 %v298, 96
    %v308 = vpop.permute.xlu0 %307
    %v311 = vmul.f32 %v197, %v306
    %v312 = vmul.f32 %v199, %v308
    %v313 = vadd.f32 %v301, %v311
    %v314 = vadd.f32 %v302, %v312
    %317 = vrot.lane.b32.xlu0 %v313, 96
    %v318 = vpop.permute.xlu0 %317
    %319 = vrot.lane.b32.xlu0 %v314, 96
    %v320 = vpop.permute.xlu0 %319
    %323 = vst.msk [vmem:[#allocation10] sm:$0xff] %vm88, %v318
    %324 = vst.msk [vmem:[#allocation10 + $0x8] sm:$0xff] %vm88, %v320
    // Predicated region
    $region38: #{tpu_custom_call.1} parent=1 // pred_check
      _
    $region39: #{tpu_custom_call.1} parent=1 // pred_check_branch
      %326 = sbr.rel (0) target = $region41
    $region40: #{tpu_custom_call.1} parent=1 // pred_region
      %s328 = ssub.s32 256, 256
      %329 = vsyncadd [#allocation4], %s328
      %s330 = sshll.u32 [#allocation10], 4
      %s331 = int_to_ptr.vmem [resolvable:$true] %s330
      %336 = dma.vmem_to_hbm [thread:$0]  %s331, 256, %s5, [#allocation4], 128, 128, 8
    $region41: #{tpu_custom_call.1} parent=1 // pred_fallthru
      _
    // Predicated region
    $region42: #{tpu_custom_call.1} parent=1 // pred_check
      _
    $region43: #{tpu_custom_call.1} parent=1 // pred_check_branch
      %338 = sbr.rel (0) target = $region45
    $region44: #{tpu_custom_call.1} parent=1 // pred_region
      %339 = dma.done [#allocation4], 256
    $region45: #{tpu_custom_call.1} parent=1 // pred_fallthru
      _
    %340 = vsyncpa [#allocation3], 1
    %341 = vsyncpa [#allocation6], 1
    %342 = vsyncpa [#allocation9], 1
    %343 = vsyncpa [#allocation4], 1

</llo_original>
